<compile_context>
chip_gen: v7x
topology: tpu7x:2x2x1
jax: 0.10.0
libtpu: 0.0.40
codegen_flags: <defaults>
</compile_context>

<pallas_src>
import functools
import math

import jax
import jax.numpy as jnp
from jax import lax
from jax.experimental import pallas as pl
from jax.experimental.pallas import tpu as pltpu

NEG_INF = -1e30  # finite "minus infinity": avoids exp(-inf - -inf) = NaN


def _seq_tile(s, max_tile=512):
    """Largest tile <= max_tile dividing s (multiples of 8 preferred)."""
    if s <= max_tile:
        return s
    for t in (512, 256, 128, 64, 32, 16, 8):
        if t <= max_tile and s % t == 0:
            return t
    return s


def _head_group(num_heads, head_dim):
    """Smallest head-group size whose flattened width (g*D) is a 128-lane multiple;
    falls back to all heads (output block then spans the full E axis)."""
    for g in range(1, num_heads + 1):
        if num_heads % g == 0 and (g * head_dim) % 128 == 0:
            return g
    return num_heads


# ---------------------------------------------------------------------------
# Q projection: x (B*Sq, E) @ Wq -> q (B, H, Sq, D), softmax scale folded in f32.
# ---------------------------------------------------------------------------
def _qproj_kernel(x_ref, w_ref, b_ref, o_ref, *, scale):
    acc = jnp.dot(x_ref[...], w_ref[0], preferred_element_type=jnp.float32)
    o_ref[0, 0] = ((acc + b_ref[0]) * scale).astype(o_ref.dtype)


def q_projection(x2d, w_hed, b_h1d, batch, seq, scale, out_dtype):
    H, E, D = w_hed.shape
    ts = _seq_tile(seq)
    ns = seq // ts
    return pl.pallas_call(
        functools.partial(_qproj_kernel, scale=scale),
        out_shape=jax.ShapeDtypeStruct((batch, H, seq, D), out_dtype),
        grid=(batch, ns, H),
        in_specs=[
            pl.BlockSpec((ts, E), lambda b, s, h: (b * ns + s, 0)),
            pl.BlockSpec((1, E, D), lambda b, s, h: (h, 0, 0)),
            pl.BlockSpec((1, 1, D), lambda b, s, h: (h, 0, 0)),
        ],
        out_specs=pl.BlockSpec((1, 1, ts, D), lambda b, s, h: (b, h, s, 0)),
        compiler_params=pltpu.CompilerParams(
            dimension_semantics=("parallel", "parallel", "parallel")),
    )(x2d, w_hed, b_h1d)


# ---------------------------------------------------------------------------
# KV projection: x (B*Sk, E) @ Wkv -> k, v each (B, H, Sk, D)
# ---------------------------------------------------------------------------
def _kvproj_kernel(x_ref, wk_ref, wv_ref, bk_ref, bv_ref, k_ref, v_ref):
    x = x_ref[...]
    k = jnp.dot(x, wk_ref[0], preferred_element_type=jnp.float32) + bk_ref[0]
    v = jnp.dot(x, wv_ref[0], preferred_element_type=jnp.float32) + bv_ref[0]
    k_ref[0, 0] = k.astype(k_ref.dtype)
    v_ref[0, 0] = v.astype(v_ref.dtype)


def kv_projection(x2d, wk_hed, wv_hed, bk_h1d, bv_h1d, batch, seq, out_dtype):
    H, E, D = wk_hed.shape
    ts = _seq_tile(seq)
    ns = seq // ts
    kv_shape = jax.ShapeDtypeStruct((batch, H, seq, D), out_dtype)
    return pl.pallas_call(
        _kvproj_kernel,
        out_shape=(kv_shape, kv_shape),
        grid=(batch, ns, H),
        in_specs=[
            pl.BlockSpec((ts, E), lambda b, s, h: (b * ns + s, 0)),
            pl.BlockSpec((1, E, D), lambda b, s, h: (h, 0, 0)),
            pl.BlockSpec((1, E, D), lambda b, s, h: (h, 0, 0)),
            pl.BlockSpec((1, 1, D), lambda b, s, h: (h, 0, 0)),
            pl.BlockSpec((1, 1, D), lambda b, s, h: (h, 0, 0)),
        ],
        out_specs=(
            pl.BlockSpec((1, 1, ts, D), lambda b, s, h: (b, h, s, 0)),
            pl.BlockSpec((1, 1, ts, D), lambda b, s, h: (b, h, s, 0)),
        ),
        compiler_params=pltpu.CompilerParams(
            dimension_semantics=("parallel", "parallel", "parallel")),
    )(x2d, wk_hed, wv_hed, bk_h1d, bv_h1d)


# ---------------------------------------------------------------------------
# Flash cross attention: online softmax over KV tiles, query-tiled, head-grouped.
# Output is written directly in (B, Sq, E) layout (heads concatenated on lanes).
# ---------------------------------------------------------------------------
def _make_flash_kernel(causal, sq_total, block_q, block_k, head_dim, hsub):
    def kernel(meta_ref, q_ref, k_ref, v_ref, bias_ref, o_ref, m_sc, l_sc, acc_sc):
        b = pl.program_id(0)
        qt = pl.program_id(2)
        kt = pl.program_id(3)

        @pl.when(kt == 0)
        def _init():
            m_sc[...] = jnp.full_like(m_sc[...], NEG_INF)
            l_sc[...] = jnp.zeros_like(l_sc[...])
            acc_sc[...] = jnp.zeros_like(acc_sc[...])

        sk_b = meta_ref[b, 0]   # valid-key count (causal offset; contiguous prefix assumed)
        kv_ub = meta_ref[b, 1]  # 1 + last unmasked key index (padding tile-skip bound)
        q_start = qt * block_q
        kv_start = kt * block_k

        def update(apply_causal_mask):
            q = q_ref[0]                                   # (Hsub, bq, D) bf16, pre-scaled
            k = k_ref[0]                                   # (Hsub, bk, D)
            v = v_ref[0]                                   # (Hsub, bk, D)
            s = jnp.einsum("hqd,hkd->hqk", q, k,
                           preferred_element_type=jnp.float32)        # (Hsub, bq, bk) f32
            s = s + bias_ref[...].astype(jnp.float32)      # additive bias (incl. key padding)
            if apply_causal_mask:
                row = q_start + lax.broadcasted_iota(
                    jnp.int32, (hsub, block_q, block_k), 1)
                col = kv_start + lax.broadcasted_iota(
                    jnp.int32, (hsub, block_q, block_k), 2)
                s = jnp.where(col > row + (sk_b - sq_total), NEG_INF, s)

            m_prev = m_sc[...]
            m_new = jnp.maximum(m_prev, jnp.max(s, axis=-1, keepdims=True))
            alpha = jnp.exp(m_prev - m_new)
            # TODO(synk): on v6e/v7x a bf16 exp here (m/l/acc kept in f32) roughly
            # doubles EUP throughput; kept f32 for precision/portability (v5e).
            p = jnp.exp(s - m_new)
            l_sc[...] = alpha * l_sc[...] + jnp.sum(p, axis=-1, keepdims=True)
            acc_sc[...] = alpha * acc_sc[...] + jnp.einsum(
                "hqk,hkd->hqd", p.astype(v.dtype), v,
                preferred_element_type=jnp.float32)
            m_sc[...] = m_new

        if causal:
            diag = q_start + (sk_b - sq_total)          # visible bound of first row of tile
            ub = jnp.minimum(kv_ub, diag + block_q)     # bound of last row + 1
            live = kv_start < ub
            fully_visible = (kv_start + block_k - 1) <= diag

            @pl.when(live & fully_visible)
            def _unmasked():
                update(False)

            @pl.when(live & jnp.logical_not(fully_visible))
            def _masked():
                update(True)
        else:
            live = kv_start < kv_ub

            @pl.when(live)
            def _visible():
                update(False)

        @pl.when(kt == pl.num_programs(3) - 1)
        def _finalize():
            l = l_sc[...]
            l = jnp.where(l == 0.0, 1.0, l)   # rows with no visible keys -> zero output
            inv = pl.reciprocal(l, approx=True)           # EUP slot, not VPU divide
            ctx = acc_sc[...] * inv                       # (Hsub, bq, D) f32
            parts = [ctx[h].astype(o_ref.dtype) for h in range(hsub)]
            o_ref[0] = parts[0] if hsub == 1 else jnp.concatenate(parts, axis=-1)

    return kernel


def flash_cross_attention(q_bhsd, k_bhsd, v_bhsd, bias_b1s, meta, causal,
                          block_q=None, block_k=None):
    B, H, Sq, D = q_bhsd.shape
    Sk = k_bhsd.shape[2]
    E = H * D
    if block_q is None:
        block_q = _seq_tile(Sq, max_tile=256)
    if block_k is None:
        block_k = _seq_tile(Sk, max_tile=512)
    assert Sq % block_q == 0 and Sk % block_k == 0
    nq, nk = Sq // block_q, Sk // block_k
    hsub = _head_group(H, D)
    n_hg = H // hsub

    def kv_index(b, hg, qt, kt, meta_ref):
        # Clamp dead (causal / beyond-padding) tiles to the last live KV block so the
        # pipeline re-uses the resident buffer instead of DMA'ing data we never read.
        ub = meta_ref[b, 1]
        if causal:
            ub = jnp.minimum(
                ub, qt * block_q + (block_q - 1) + meta_ref[b, 0] - Sq + 1)
        last = (jnp.maximum(ub, 1) - 1) // block_k
        return (b, hg, jnp.minimum(kt, last), 0)

    kernel = _make_flash_kernel(causal, Sq, block_q, block_k, D, hsub)
    grid_spec = pltpu.PrefetchScalarGridSpec(
        num_scalar_prefetch=1,
        grid=(B, n_hg, nq, nk),
        in_specs=[
            pl.BlockSpec((1, hsub, block_q, D),
                         lambda b, hg, qt, kt, meta: (b, hg, qt, 0)),
            pl.BlockSpec((1, hsub, block_k, D), kv_index),
            pl.BlockSpec((1, hsub, block_k, D), kv_index),
            pl.BlockSpec((1, 1, block_k), lambda b, hg, qt, kt, meta: (b, 0, kt)),
        ],
        out_specs=pl.BlockSpec((1, block_q, hsub * D),
                               lambda b, hg, qt, kt, meta: (b, qt, hg)),
        scratch_shapes=[
            pltpu.VMEM((hsub, block_q, 1), jnp.float32),   # running max
            pltpu.VMEM((hsub, block_q, 1), jnp.float32),   # running denominator
            pltpu.VMEM((hsub, block_q, D), jnp.float32),   # running numerator
        ],
    )
    # TODO(synk): consider pipeline_mode=pl.Buffered(3) on the K/V specs for very
    # small head_dim once VMEM headroom is verified on v7x.
    return pl.pallas_call(
        kernel,
        out_shape=jax.ShapeDtypeStruct((B, Sq, E), q_bhsd.dtype),
        grid_spec=grid_spec,
        compiler_params=pltpu.CompilerParams(
            dimension_semantics=("parallel", "parallel", "parallel", "arbitrary")),
    )(meta, q_bhsd, k_bhsd, v_bhsd, bias_b1s)


# ---------------------------------------------------------------------------
# Output projection: single (B*Sq, E) @ (E, E) GEMM (contracting over E = H*D).
# ---------------------------------------------------------------------------
def _outproj_kernel(x_ref, w_ref, b_ref, o_ref, acc_ref):
    kt = pl.program_id(1)

    @pl.when(kt == 0)
    def _init():
        acc_ref[...] = jnp.zeros_like(acc_ref[...])

    acc_ref[...] += jnp.dot(x_ref[...], w_ref[...],
                            preferred_element_type=jnp.float32)

    @pl.when(kt == pl.num_programs(1) - 1)
    def _store():
        o_ref[...] = (acc_ref[...] + b_ref[...]).astype(o_ref.dtype)


def out_projection(ctx_2d, w_ee, b_1e, out_dtype, tm=256, tk=512):
    M, E = ctx_2d.shape
    tm = _seq_tile(M, max_tile=tm)
    tk = _seq_tile(E, max_tile=tk)
    return pl.pallas_call(
        _outproj_kernel,
        out_shape=jax.ShapeDtypeStruct((M, E), out_dtype),
        grid=(M // tm, E // tk),
        in_specs=[
            pl.BlockSpec((tm, tk), lambda m, k: (m, k)),
            pl.BlockSpec((tk, E), lambda m, k: (k, 0)),
            pl.BlockSpec((1, E), lambda m, k: (0, 0)),
        ],
        out_specs=pl.BlockSpec((tm, E), lambda m, k: (m, 0)),
        scratch_shapes=[pltpu.VMEM((tm, E), jnp.float32)],
        compiler_params=pltpu.CompilerParams(
            dimension_semantics=("parallel", "arbitrary")),
    )(ctx_2d, w_ee, b_1e)


# ---------------------------------------------------------------------------
# FlashMHA forward (attention_type='cross', eval mode -> dropout is identity)
# ---------------------------------------------------------------------------
def flash_mha_cross_forward(params, tgt, mem, attn_bias, num_heads,
                            memory_key_padding_mask=None,
                            memory_is_causal=False,
                            softmax_scale=None,
                            compute_dtype=jnp.bfloat16,
                            block_q=None, block_k=None):
    B, Sq, E = tgt.shape
    Sk = mem.shape[1]
    H = num_heads
    D = E // H
    scale = softmax_scale if softmax_scale is not None else 1.0 / math.sqrt(D)
    cd = compute_dtype

    # Head-split weight rearrangement (parameters only) so the projection kernels
    # emit (B, H, S, D) directly.
    wq_hed = params["wq_w"].reshape(E, H, D).transpose(1, 0, 2).astype(cd)
    bq_h1d = params["wq_b"].reshape(H, 1, D)
    wk_hed = params["wkv_w"][:, :E].reshape(E, H, D).transpose(1, 0, 2).astype(cd)
    wv_hed = params["wkv_w"][:, E:].reshape(E, H, D).transpose(1, 0, 2).astype(cd)
    bk_h1d = params["wkv_b"][:, :E].reshape(H, 1, D)
    bv_h1d = params["wkv_b"][:, E:].reshape(H, 1, D)
    wo_ee = params["out_w"].astype(cd)
    bo_1e = params["out_b"]

    # Projections (bf16 MXU operands, f32 accumulation; softmax scale folded into Q).
    q_bhsd = q_projection(tgt.reshape(B * Sq, E).astype(cd), wq_hed, bq_h1d,
                          B, Sq, scale, cd)
    k_bhsd, v_bhsd = kv_projection(mem.reshape(B * Sk, E).astype(cd),
                                   wk_hed, wv_hed, bk_h1d, bv_h1d, B, Sk, cd)

    # Additive bias = attn_bias + key-padding mask (finite -inf); per-batch scalars
    # (valid-key count, last-valid-key bound) are scalar-prefetched for causal offset
    # and dead-tile skipping.
    if attn_bias is None:
        attn_bias = jnp.zeros((B, Sk), jnp.float32)
    bias = attn_bias.astype(jnp.float32)
    if memory_key_padding_mask is not None:
        mask = memory_key_padding_mask
        bias = bias + jnp.where(mask, 0.0, NEG_INF)
        sk_lens = mask.sum(-1).astype(jnp.int32)
        kv_ub = jnp.max(
            jnp.where(mask, jnp.arange(Sk, dtype=jnp.int32) + 1, 0), axis=-1)
    else:
        sk_lens = jnp.full((B,), Sk, dtype=jnp.int32)
        kv_ub = jnp.full((B,), Sk, dtype=jnp.int32)
    meta = jnp.stack([sk_lens, kv_ub.astype(jnp.int32)], axis=1)   # (B, 2) int32
    bias_b1s = bias.reshape(B, 1, Sk)

    ctx_bse = flash_cross_attention(q_bhsd, k_bhsd, v_bhsd, bias_b1s, meta,
                                    memory_is_causal,
                                    block_q=block_q, block_k=block_k)

    out2d = out_projection(ctx_bse.reshape(B * Sq, E), wo_ee, bo_1e, jnp.float32)
    # TODO(synk): attention dropout (self.drop) is identity in eval mode; training-time
    # dropout on the attention weights is not implemented.
    return out2d.reshape(B, Sq, E), None


# ---------------------------------------------------------------------------
# Deterministic parameter init (mimics nn.Linear uniform(-1/sqrt(in), 1/sqrt(in)))
# ---------------------------------------------------------------------------
def init_params(key, embed_dim):
    def lin(k, fan_in, fan_out):
        kw, kb = jax.random.split(k)
        bound = 1.0 / math.sqrt(fan_in)
        w = jax.random.uniform(kw, (fan_in, fan_out), jnp.float32, -bound, bound)
        b = jax.random.uniform(kb, (1, fan_out), jnp.float32, -bound, bound)
        return w, b

    k1, k2, k3 = jax.random.split(key, 3)
    wq_w, wq_b = lin(k1, embed_dim, embed_dim)
    wkv_w, wkv_b = lin(k2, embed_dim, 2 * embed_dim)
    out_w, out_b = lin(k3, embed_dim, embed_dim)
    return dict(wq_w=wq_w, wq_b=wq_b, wkv_w=wkv_w, wkv_b=wkv_b,
                out_w=out_w, out_b=out_b)


# ---------------------------------------------------------------------------
# Pure-JAX f32 reference (mirrors the PyTorch CrossAttention / FlashMHA math)
# ---------------------------------------------------------------------------
def reference_forward(params, tgt, mem, attn_bias, num_heads,
                      memory_key_padding_mask=None, memory_is_causal=False):
    B, Sq, E = tgt.shape
    Sk = mem.shape[1]
    H = num_heads
    D = E // H
    q = (tgt.reshape(B * Sq, E) @ params["wq_w"] + params["wq_b"]).reshape(B, Sq, H, D)
    kv = (mem.reshape(B * Sk, E) @ params["wkv_w"] + params["wkv_b"]).reshape(B, Sk, 2, H, D)
    k, v = kv[:, :, 0], kv[:, :, 1]
    scale = 1.0 / math.sqrt(D)
    scores = jnp.einsum("bthd,bshd->bhts", q, k * scale)
    scores = scores + attn_bias[:, None, None, :]
    if memory_key_padding_mask is not None:
        pad = jnp.where(memory_key_padding_mask, 0.0, NEG_INF)
        scores = scores + pad[:, None, None, :]
    if memory_is_causal:
        row = jnp.arange(Sq)[:, None]
        col = jnp.arange(Sk)[None, :]
        if memory_key_padding_mask is not None:
            sk = memory_key_padding_mask.sum(-1).astype(jnp.int32)[:, None, None, None]
        else:
            sk = Sk
        cond = col[None, None, :, :] > row[None, None, :, :] + (sk - Sq)
        scores = jnp.where(cond, NEG_INF, scores)
    attn = jax.nn.softmax(scores, axis=-1)
    ctx = jnp.einsum("bhts,bshd->bthd", attn, v)
    out = ctx.reshape(B * Sq, E) @ params["out_w"] + params["out_b"]
    return out.reshape(B, Sq, E)


# ---------------------------------------------------------------------------
if __name__ == "__main__":
    B, Sq, Sk = 2, 16, 256
    num_heads, head_dim = 4, 8
    embed_dim = num_heads * head_dim  # 32

    root = jax.random.PRNGKey(0)
    kp, ktg, kmem, kbias = jax.random.split(root, 4)

    params = init_params(kp, embed_dim)
    tgt = jax.random.normal(ktg, (B, Sq, embed_dim), jnp.float32)
    mem = jax.random.normal(kmem, (B, Sk, embed_dim), jnp.float32)
    attn_bias = 0.1 * jax.random.normal(kbias, (B, Sk), jnp.float32)
    # key padding mask: True = keep (last 5 keys of batch 1 masked out)
    memory_key_padding_mask = jnp.ones((B, Sk), dtype=bool).at[1, -5:].set(False)

    for causal in (False, True):
        out, attn_weights = flash_mha_cross_forward(
            params, tgt, mem, attn_bias, num_heads,
            memory_key_padding_mask=memory_key_padding_mask,
            memory_is_causal=causal,
            block_q=8, block_k=128)   # 2 Q tiles x 2 KV tiles: exercises tiling + online softmax
        out = jax.block_until_ready(out)

        ref = reference_forward(
            params, tgt, mem, attn_bias, num_heads,
            memory_key_padding_mask=memory_key_padding_mask,
            memory_is_causal=causal)

        assert out.shape == (B, Sq, embed_dim)
        assert jnp.allclose(out, ref, atol=5e-2, rtol=5e-2), \
            f"mismatch vs reference (causal={causal})"

    print("KERNEL_OK")
</pallas_src>

<mosaic_0001>
module attributes {stable_mosaic.version = 11 : i64} {
  func.func @_qproj_kernel(%arg0: i32, %arg1: i32, %arg2: i32, %arg3: memref<16x32xbf16, #tpu.memory_space<vmem>>, %arg4: memref<1x32x8xbf16, #tpu.memory_space<vmem>>, %arg5: memref<1x1x8xf32, #tpu.memory_space<vmem>>, %arg6: memref<1x1x16x8xbf16, #tpu.memory_space<vmem>>) attributes {dimension_semantics = [#tpu.dimension_semantics<parallel>, #tpu.dimension_semantics<parallel>, #tpu.dimension_semantics<parallel>], iteration_bounds = array<i64: 2, 1, 4>, scalar_prefetch = 0 : i64, scratch_operands = 0 : i64, tpu.core_type = #tpu.core_type<tc>, window_params = [{transform_indices = @transform_0, window_bounds = array<i64: 16, 32>}, {transform_indices = @transform_1, window_bounds = array<i64: 1, 32, 8>}, {transform_indices = @transform_2, window_bounds = array<i64: 1, 1, 8>}, {transform_indices = @transform_3, window_bounds = array<i64: 1, 1, 16, 8>}]} {
    %c0 = arith.constant 0 : index
    %c0_0 = arith.constant 0 : index
    %0 = vector.load %arg3[%c0, %c0_0] : memref<16x32xbf16, #tpu.memory_space<vmem>>, vector<16x32xbf16>
    %c0_1 = arith.constant 0 : index
    %c0_2 = arith.constant 0 : index
    %c0_3 = arith.constant 0 : index
    %1 = vector.load %arg4[%c0_1, %c0_2, %c0_3] : memref<1x32x8xbf16, #tpu.memory_space<vmem>>, vector<1x32x8xbf16>
    %2 = vector.shape_cast %1 : vector<1x32x8xbf16> to vector<32x8xbf16>
    %cst = arith.constant dense<0.000000e+00> : vector<16x8xf32>
    %3 = tpu.matmul %0, %2, %cst {dimension_numbers = #tpu.dot_dimension_numbers<[1], [0], [0], [1], [0, 0, 1, 1], [], []>} : vector<16x32xbf16>, vector<32x8xbf16>, vector<16x8xf32> -> vector<16x8xf32>
    %c0_4 = arith.constant 0 : index
    %c0_5 = arith.constant 0 : index
    %c0_6 = arith.constant 0 : index
    %4 = vector.load %arg5[%c0_4, %c0_5, %c0_6] : memref<1x1x8xf32, #tpu.memory_space<vmem>>, vector<1x1x8xf32>
    %5 = vector.shape_cast %4 : vector<1x1x8xf32> to vector<1x8xf32>
    %6 = vector.broadcast %5 : vector<1x8xf32> to vector<16x8xf32>
    %7 = arith.addf %3, %6 : vector<16x8xf32>
    %cst_7 = arith.constant 0.353553385 : f32
    %8 = vector.broadcast %cst_7 : f32 to vector<16x8xf32>
    %9 = arith.mulf %7, %8 : vector<16x8xf32>
    %10 = arith.truncf %9 : vector<16x8xf32> to vector<16x8xbf16>
    %c0_8 = arith.constant 0 : index
    %c0_9 = arith.constant 0 : index
    %c0_10 = arith.constant 0 : index
    %c0_11 = arith.constant 0 : index
    %11 = vector.load %arg6[%c0_8, %c0_9, %c0_10, %c0_11] : memref<1x1x16x8xbf16, #tpu.memory_space<vmem>>, vector<1x1x16x8xbf16>
    %12 = vector.shape_cast %11 : vector<1x1x16x8xbf16> to vector<16x8xbf16>
    %13 = vector.shape_cast %10 : vector<16x8xbf16> to vector<1x1x16x8xbf16>
    tpu.vector_store %arg6[%c0_8, %c0_9, %c0_10, %c0_11], %13 {strides = array<i32>} : memref<1x1x16x8xbf16, #tpu.memory_space<vmem>>, vector<1x1x16x8xbf16>,
    return
  }
  func.func @transform_0(%arg0: i32, %arg1: i32, %arg2: i32) -> (i32, i32) {
    %c1_i32 = arith.constant 1 : i32
    %0 = arith.muli %arg0, %c1_i32 : i32
    %1 = arith.addi %0, %arg1 : i32
    %c0_i32 = arith.constant 0 : i32
    %c0_i32_0 = arith.constant 0 : i32
    return %1, %c0_i32 : i32, i32
  }
  func.func @transform_1(%arg0: i32, %arg1: i32, %arg2: i32) -> (i32, i32, i32) {
    %c0_i32 = arith.constant 0 : i32
    %c0_i32_0 = arith.constant 0 : i32
    %c0_i32_1 = arith.constant 0 : i32
    return %arg2, %c0_i32, %c0_i32_0 : i32, i32, i32
  }
  func.func @transform_2(%arg0: i32, %arg1: i32, %arg2: i32) -> (i32, i32, i32) {
    %c0_i32 = arith.constant 0 : i32
    %c0_i32_0 = arith.constant 0 : i32
    %c0_i32_1 = arith.constant 0 : i32
    return %arg2, %c0_i32, %c0_i32_0 : i32, i32, i32
  }
  func.func @transform_3(%arg0: i32, %arg1: i32, %arg2: i32) -> (i32, i32, i32, i32) {
    %c0_i32 = arith.constant 0 : i32
    %c0_i32_0 = arith.constant 0 : i32
    return %arg0, %arg2, %arg1, %c0_i32 : i32, i32, i32, i32
  }
}

</mosaic_0001>

<llo_original>
// kernel: tpu_custom_call.1
$region0: #{tpu_custom_call.1}
  #allocation0 [shape = 'u32[]', space=smem, size = 0x4, offset = 0x4, fixed_abs, tag = 'smem constant byte address 0x4 - core index']
  #allocation1 [shape = 'u32[144,128]{1,0:T(1,128)}', space=vmem, size = 0x12000, scoped, tag = 'internal scratch']
  %s0 = inlined_call_operand.vmem [shape: bf16[32,32], index: 0, kind: input, shape index: {}]
  %s1 = inlined_call_operand.vmem [shape: bf16[4,32,8], index: 1, kind: input, shape index: {}]
  %s2 = inlined_call_operand.vmem [shape: f32[4,1,8], index: 2, kind: input, shape index: {}]
  %s3 = inlined_call_operand.vmem [shape: bf16[2,4,16,8], index: 3, kind: output, shape index: {}]
  %s4 = sld [smem:[#allocation0]]
  $region45: #{tpu_custom_call.1} parent=0
    _
  %s6 = ssub.s32 1, %s4
  %s7 = scalar_select 0, %s6, %s4
  loop: start=0, step=1, limit=10
  $region2: #{tpu_custom_call.1} parent=0 // loop_pre_header
    _
  $region3: #{tpu_custom_call.1} parent=0 // loop_header
    %s9 = sphi 0, %s13
    %p10 = scmp.ge.s32.totalorder %s9, 10
    %s16 = sphi 0, %s35
    %s17 = sphi 0, %s31
    %s18 = sphi 0, %s27
    %s19 = sphi 0, %s16
    %s20 = sphi 0, %s17
    %s21 = sphi 0, %s18
    %s22 = sphi 0, %s19
    %s23 = sphi 0, %s20
    %s24 = sphi 0, %s21
    %s40 = sphi 0, %s42
    %s43 = sphi 0, %s40
    %s44 = sphi 0, %s43
    %s60 = sphi 0, %s44
    %s66 = sphi 0, %s68
    %s69 = sphi 0, %s66
    %s70 = sphi 0, %s69
    %s86 = sphi 0, %s70
    %s92 = sphi 0, %s94
    %s95 = sphi 0, %s92
    %s96 = sphi 0, %s95
    %s112 = sphi 0, %s96
    %s122 = sphi 0, %s124
    %s125 = sphi 0, %s122
    %s126 = sphi 0, %s125
    %s142 = sphi 0, %s126
  $region4: #{tpu_custom_call.1} parent=0 // loop_header_branch
    %12 = sbr.rel (%p10) target = $region8
  $region5: #{tpu_custom_call.1} parent=0 // loop_body
    %s14 = ssub.s32 %s9, 1
    %s15 = ssub.s32 %s9, 2
    %s25 = sadd.s32 1, %s18
    %p26 = scmp.ge.s32.totalorder %s25, 4
    %s27 = scalar_select %p26, 0, %s25
    %s28 = sadd.s32 1, %s17
    %s29 = scalar_select %p26, %s28, %s17
    %p30 = scmp.ge.s32.totalorder %s29, 1
    %s31 = scalar_select %p30, 0, %s29
    %s32 = sadd.s32 1, %s16
    %s33 = scalar_select %p30, %s32, %s16
    %p34 = scmp.ge.s32.totalorder %s33, 2
    %s35 = scalar_select %p34, 0, %s33
    %s36 = sadd.s32 %s16, %s17
    %s37 = sadd.s32 %s35, %s31
    %s38 = ssub.s32 %s36, %s37
    %p39 = scmp.eq.s32.totalorder %s38, 0
    %s41 = sadd.s32 %s40, 1
    %s42 = scalar_select %p39, %s40, %s41
    %p45 = pneg %p39
    %p46 = scmp.eq.s32.totalorder %s9, 7
    %p47 = por %p45, %p46
    %p48 = scmp.ne.s32.totalorder %s40, %s43
    %p49 = scmp.eq.s32.totalorder %s9, 0
    %p50 = por %p48, %p49
    %p51 = scmp.ne.s32.totalorder %s40, %s43
    %p52 = scmp.eq.s32.totalorder %s14, 7
    %p53 = por %p51, %p52
    %p54 = scmp.ne.s32.totalorder %s43, %s44
    %p55 = scmp.eq.s32.totalorder %s14, 0
    %p56 = por %p54, %p55
    %p57 = scmp.ne.s32.totalorder %s43, %s44
    %p58 = scmp.eq.s32.totalorder %s15, 7
    %p59 = por %p57, %p58
    %p61 = scmp.ne.s32.totalorder %s44, %s60
    %p62 = scmp.eq.s32.totalorder %s15, 0
    %p63 = por %p61, %p62
    %s64 = ssub.s32 %s18, %s27
    %p65 = scmp.eq.s32.totalorder %s64, 0
    %s67 = sadd.s32 %s66, 1
    %s68 = scalar_select %p65, %s66, %s67
    %p71 = pneg %p65
    %p72 = scmp.eq.s32.totalorder %s9, 7
    %p73 = por %p71, %p72
    %p74 = scmp.ne.s32.totalorder %s66, %s69
    %p75 = scmp.eq.s32.totalorder %s9, 0
    %p76 = por %p74, %p75
    %p77 = scmp.ne.s32.totalorder %s66, %s69
    %p78 = scmp.eq.s32.totalorder %s14, 7
    %p79 = por %p77, %p78
    %p80 = scmp.ne.s32.totalorder %s69, %s70
    %p81 = scmp.eq.s32.totalorder %s14, 0
    %p82 = por %p80, %p81
    %p83 = scmp.ne.s32.totalorder %s69, %s70
    %p84 = scmp.eq.s32.totalorder %s15, 7
    %p85 = por %p83, %p84
    %p87 = scmp.ne.s32.totalorder %s70, %s86
    %p88 = scmp.eq.s32.totalorder %s15, 0
    %p89 = por %p87, %p88
    %s90 = ssub.s32 %s18, %s27
    %p91 = scmp.eq.s32.totalorder %s90, 0
    %s93 = sadd.s32 %s92, 1
    %s94 = scalar_select %p91, %s92, %s93
    %p97 = pneg %p91
    %p98 = scmp.eq.s32.totalorder %s9, 7
    %p99 = por %p97, %p98
    %p100 = scmp.ne.s32.totalorder %s92, %s95
    %p101 = scmp.eq.s32.totalorder %s9, 0
    %p102 = por %p100, %p101
    %p103 = scmp.ne.s32.totalorder %s92, %s95
    %p104 = scmp.eq.s32.totalorder %s14, 7
    %p105 = por %p103, %p104
    %p106 = scmp.ne.s32.totalorder %s95, %s96
    %p107 = scmp.eq.s32.totalorder %s14, 0
    %p108 = por %p106, %p107
    %p109 = scmp.ne.s32.totalorder %s95, %s96
    %p110 = scmp.eq.s32.totalorder %s15, 7
    %p111 = por %p109, %p110
    %p113 = scmp.ne.s32.totalorder %s96, %s112
    %p114 = scmp.eq.s32.totalorder %s15, 0
    %p115 = por %p113, %p114
    %s116 = ssub.s32 %s16, %s35
    %s117 = ssub.s32 %s18, %s27
    %s118 = sor.u32 %s116, %s117
    %s119 = ssub.s32 %s17, %s31
    %s120 = sor.u32 %s118, %s119
    %p121 = scmp.eq.s32.totalorder %s120, 0
    %s123 = sadd.s32 %s122, 1
    %s124 = scalar_select %p121, %s122, %s123
    %p127 = pneg %p121
    %p128 = scmp.eq.s32.totalorder %s9, 7
    %p129 = por %p127, %p128
    %p130 = scmp.ne.s32.totalorder %s122, %s125
    %p131 = scmp.eq.s32.totalorder %s9, 0
    %p132 = por %p130, %p131
    %p133 = scmp.ne.s32.totalorder %s122, %s125
    %p134 = scmp.eq.s32.totalorder %s14, 7
    %p135 = por %p133, %p134
    %p136 = scmp.ne.s32.totalorder %s125, %s126
    %p137 = scmp.eq.s32.totalorder %s14, 0
    %p138 = por %p136, %p137
    %p139 = scmp.ne.s32.totalorder %s125, %s126
    %p140 = scmp.eq.s32.totalorder %s15, 7
    %p141 = por %p139, %p140
    %p143 = scmp.ne.s32.totalorder %s126, %s142
    %p144 = scmp.eq.s32.totalorder %s15, 0
    %p145 = por %p143, %p144
    %p146 = scmp.le.s32.totalorder 1, %s9
    %p147 = scmp.lt.s32.totalorder %s9, 9
    %p148 = pnand %p146, %p147
    %p149 = pneg %p148
    // Predicated region
    $region9: #{tpu_custom_call.1} parent=5 // pred_check
      _
    $region10: #{tpu_custom_call.1} parent=5 // pred_check_branch
      %151 = sbr.rel (%p148) target = $region12
    $region11: #{tpu_custom_call.1} parent=5 // pred_region
      %s152 = ssub.s32 %s9, 1
    $region12: #{tpu_custom_call.1} parent=5 // pred_fallthru
      _
    %p153 = scmp.lt.s32.totalorder %s9, 8
    // Predicated region
    $region13: #{tpu_custom_call.1} parent=5 // pred_check
      %p154 = pneg %p153
    $region14: #{tpu_custom_call.1} parent=5 // pred_check_branch
      %156 = sbr.rel (%p154) target = $region16
    $region15: #{tpu_custom_call.1} parent=5 // pred_region
      // Predicated region
      $region17: #{tpu_custom_call.1} parent=15 // pred_check
        %p157 = pneg %p50
      $region18: #{tpu_custom_call.1} parent=15 // pred_check_branch
        %159 = sbr.rel (%p157) target = $region20
      $region19: #{tpu_custom_call.1} parent=15 // pred_region
        %s160 = sadd.s32 %s16, %s17
        %s161 = smul.u32 2, %s160
        %p162 = scmp.lt.s32.totalorder %s161, 3
        %s163 = scalar_select %p162, %s161, 3
        %s164 = smul.addr %s163, 4
        %s165 = scalar_lea.vmem %s0, %s164
        %s166 = sadd.s32 %s16, %s17
        %s167 = smul.u32 2, %s166
      $region20: #{tpu_custom_call.1} parent=15 // pred_fallthru
        _
      // Predicated region
      $region21: #{tpu_custom_call.1} parent=15 // pred_check
        %p168 = pneg %p76
      $region22: #{tpu_custom_call.1} parent=15 // pred_check_branch
        %170 = sbr.rel (%p168) target = $region24
      $region23: #{tpu_custom_call.1} parent=15 // pred_region
        %p171 = scmp.lt.s32.totalorder %s18, 3
        %s172 = scalar_select %p171, %s18, 3
        %s173 = smul.addr %s172, 4
        %s174 = smul.addr %s173, 4
        %s175 = scalar_lea.vmem %s1, %s174
      $region24: #{tpu_custom_call.1} parent=15 // pred_fallthru
        _
      // Predicated region
      $region25: #{tpu_custom_call.1} parent=15 // pred_check
        %p176 = pneg %p102
      $region26: #{tpu_custom_call.1} parent=15 // pred_check_branch
        %178 = sbr.rel (%p176) target = $region28
      $region27: #{tpu_custom_call.1} parent=15 // pred_region
        %p179 = scmp.lt.s32.totalorder %s18, 3
        %s180 = scalar_select %p179, %s18, 3
        %s181 = scalar_lea.vmem %s2, %s180
      $region28: #{tpu_custom_call.1} parent=15 // pred_fallthru
        _
    $region16: #{tpu_custom_call.1} parent=5 // pred_fallthru
      _
    %p182 = scmp.le.s32.totalorder 1, %s9
    %p183 = scmp.lt.s32.totalorder %s9, 9
    %p184 = pnand %p182, %p183
    %p185 = pneg %p184
    // Predicated region
    $region29: #{tpu_custom_call.1} parent=5 // pred_check
      _
    $region30: #{tpu_custom_call.1} parent=5 // pred_check_branch
      %187 = sbr.rel (%p184) target = $region32
    $region31: #{tpu_custom_call.1} parent=5 // pred_region
      %s188 = ssub.s32 %s9, 1
      %s189 = sadd.s32 %s19, %s20
      %s190 = smul.u32 2, %s189
      %p191 = scmp.lt.s32.totalorder %s190, 3
      %s192 = scalar_select %p191, %s190, 3
      %s193 = smul.addr %s192, 4
      %s194 = scalar_lea.vmem %s0, %s193
      %p195 = pneg %p56
      %p196 = pneg %p53
      %p197 = scmp.lt.s32.totalorder %s21, 3
      %s198 = scalar_select %p197, %s21, 3
      %s199 = smul.addr %s198, 4
      %s200 = smul.addr %s199, 4
      %s201 = scalar_lea.vmem %s1, %s200
      %p202 = pneg %p82
      %p203 = pneg %p79
      %p204 = scmp.lt.s32.totalorder %s21, 3
      %s205 = scalar_select %p204, %s21, 3
      %s206 = scalar_lea.vmem %s2, %s205
      %p207 = pneg %p108
      %p208 = pneg %p105
      %p209 = pneg %p138
      %p210 = pneg %p135
      %s211 = smul.u32 2, %s20
      %p212 = scmp.lt.s32.totalorder %s19, 1
      %s213 = scalar_select %p212, %s19, 1
      %p214 = scmp.lt.s32.totalorder %s21, 3
      %s215 = scalar_select %p214, %s21, 3
      %p216 = scmp.lt.s32.totalorder %s211, 1
      %s217 = scalar_select %p216, %s211, 1
      %s218 = smul.addr %s215, 2
      %s219 = sadd.s32 %s217, %s218
      %s220 = smul.addr %s213, 8
      %s221 = sadd.s32 %s219, %s220
      %s222 = smul.addr %s221, 4
      %s223 = scalar_lea.vmem %s3, %s222
      %s224 = sadd.s32 %s19, %s20
      %s225 = smul.u32 2, %s224
      %p226 = scmp.lt.s32.totalorder %s225, 3
      %s227 = scalar_select %p226, %s225, 3
      %s228 = smul.addr %s227, 4
      %s229 = scalar_lea.vmem %s0, %s228
      %s230 = sadd.s32 %s19, %s20
      %s231 = smul.u32 2, %s230
      %p232 = scmp.lt.s32.totalorder %s21, 3
      %s233 = scalar_select %p232, %s21, 3
      %s234 = smul.addr %s233, 4
      %s235 = smul.addr %s234, 4
      %s236 = scalar_lea.vmem %s1, %s235
      %p237 = scmp.lt.s32.totalorder %s21, 3
      %s238 = scalar_select %p237, %s21, 3
      %s239 = scalar_lea.vmem %s2, %s238
      %s240 = smul.u32 2, %s20
      %p241 = scmp.lt.s32.totalorder %s19, 1
      %s242 = scalar_select %p241, %s19, 1
      %p243 = scmp.lt.s32.totalorder %s21, 3
      %s244 = scalar_select %p243, %s21, 3
      %p245 = scmp.lt.s32.totalorder %s240, 1
      %s246 = scalar_select %p245, %s240, 1
      %s247 = smul.addr %s244, 2
      %s248 = sadd.s32 %s246, %s247
      %s249 = smul.addr %s242, 8
      %s250 = sadd.s32 %s248, %s249
      %s251 = smul.addr %s250, 4
      %s252 = scalar_lea.vmem %s3, %s251
      %s253 = smul.u32 2, %s20
      %v255 = vld [vmem:[%s229] sm:$0xf]
      %v256 = vld [vmem:[%s229 + $0x4] sm:$0xf]
      %v257 = vld [vmem:[%s236] sm:$0xf]
      %v258 = vld [vmem:[%s236 + $0x4] sm:$0xf]
      %v259 = vld [vmem:[%s236 + $0x8] sm:$0xf]
      %v260 = vld [vmem:[%s236 + $0xc] sm:$0xf]
      %v261 = vld [vmem:[%s239] sm:$0x1]
      %v263 = vlaneseq
      %v264 = vshrl.u32 %v263, 7
      %v265 = vsub.s32 0, %v264
      %v266 = vrot.slane %v261, %v265
      %v270 = vunpack.c.l.b16 %v255
      %v271 = vunpack.c.l.b16 %v256
      %v272 = vpack.c.b16 %v271, %v270
      %v277 = vunpack.c.l.b16 %v257
      %v278 = vunpack.c.l.b16 %v258
      %v279 = vunpack.c.l.b16 %v259
      %v280 = vunpack.c.l.b16 %v260
      %v281 = vpack.c.b16 %v278, %v277
      %v282 = vpack.c.b16 %v280, %v279
      %vm285 = vcmask 261120
      %v287 = vsel %vm285, %v272, 0
      %289 = vmatprep.subr.bf16.mxu0 0
      %290 = vmatpush1.bf16.msra.mxu0 %v281
      %291 = vmatprep.subr.bf16.mxu0 0
      %292 = vmatpush1.bf16.msra.mxu0 %v282
      %293 = vmatprep.subr.bf16.mxu0 0
      %294 = vmatpush1.bf16.msra.mxu0 0
      %295 = vmatprep.subr.bf16.mxu0 0
      %296 = vmatpush1.bf16.msra.mxu0 0
      %297 = vmatprep.subr.bf16.mxu0 0
      %298 = vmatpush1.bf16.msra.mxu0 0
      %299 = vmatprep.subr.bf16.mxu0 0
      %300 = vmatpush1.bf16.msra.mxu0 0
      %301 = vmatprep.subr.bf16.mxu0 0
      %302 = vmatpush1.bf16.msra.mxu0 0
      %303 = vmatprep.subr.bf16.mxu0 0
      %304 = vmatpush1.bf16.msra.mxu0 0
      %305 = vmatprep.subr.bf16.mxu0 0
      %306 = vmatpush1.bf16.msra.mxu0 0
      %307 = vmatprep.subr.bf16.mxu0 0
      %308 = vmatpush1.bf16.msra.mxu0 0
      %309 = vmatprep.subr.bf16.mxu0 0
      %310 = vmatpush1.bf16.msra.mxu0 0
      %311 = vmatprep.subr.bf16.mxu0 0
      %312 = vmatpush1.bf16.msra.mxu0 0
      %313 = vmatprep.subr.bf16.mxu0 0
      %314 = vmatpush1.bf16.msra.mxu0 0
      %315 = vmatprep.subr.bf16.mxu0 0
      %316 = vmatpush1.bf16.msra.mxu0 0
      %317 = vmatprep.subr.bf16.mxu0 0
      %318 = vmatpush1.bf16.msra.mxu0 0
      %319 = vmatprep.subr.bf16.mxu0 0
      %320 = vmatpush1.bf16.msra.mxu0 0
      %321 = vmatprep.mubr.bf16.mxu0 0
      %322 = vmatmul.mubr.bf16.gmra.mrb[0].mxu0 %v287
      %v323 = vpop.f32.mrb[0].mxu0
      %v324 = vadd.f32 %v266, %v323
      %v325 = vpop.f32.mrb[0].mxu0
      %v326 = vpop.f32.mrb[0].mxu0
      %v327 = vadd.f32 %v266, %v326
      %v328 = vpop.f32.mrb[0].mxu0
      %329 = vdwg.mxu0
      %v330 = vmul.f32 %v324, 0.35355338
      %v331 = vmul.f32 %v327, 0.35355338
      %v332 = vpack.c.bf16 %v331, %v330
      %v334 = vunpack.c.l.b16 %v332
      %v335 = vunpack.c.h.b16 %v332
      %v336 = vpack.c.b16 %v334, %v334
      %v337 = vpack.c.b16 %v335, %v335
      %vm340 = vcmask 60416
      %341 = vst.msk [vmem:[%s252] sm:$0xf] %vm340, %v336
      %342 = vst.msk [vmem:[%s252 + $0x4] sm:$0xf] %vm340, %v337
      %s343 = smul.u32 2, %s20
      %p344 = scmp.lt.s32.totalorder %s19, 1
      %s345 = scalar_select %p344, %s19, 1
      %p346 = scmp.lt.s32.totalorder %s21, 3
      %s347 = scalar_select %p346, %s21, 3
      %p348 = scmp.lt.s32.totalorder %s343, 1
      %s349 = scalar_select %p348, %s343, 1
      %s350 = smul.addr %s347, 2
      %s351 = sadd.s32 %s349, %s350
      %s352 = smul.addr %s345, 8
      %s353 = sadd.s32 %s351, %s352
      %s354 = smul.addr %s353, 4
      %s355 = scalar_lea.vmem %s3, %s354
      // Predicated region
      $region33: #{tpu_custom_call.1} parent=31 // pred_check
        %p356 = pneg %p135
      $region34: #{tpu_custom_call.1} parent=31 // pred_check_branch
        %358 = sbr.rel (%p356) target = $region36
      $region35: #{tpu_custom_call.1} parent=31 // pred_region
        %s359 = smul.u32 2, %s20
      $region36: #{tpu_custom_call.1} parent=31 // pred_fallthru
        _
    $region32: #{tpu_custom_call.1} parent=5 // pred_fallthru
      _
    %p360 = scmp.le.s32.totalorder 2, %s9
    // Predicated region
    $region37: #{tpu_custom_call.1} parent=5 // pred_check
      %p361 = pneg %p360
    $region38: #{tpu_custom_call.1} parent=5 // pred_check_branch
      %363 = sbr.rel (%p361) target = $region40
    $region39: #{tpu_custom_call.1} parent=5 // pred_region
      %s364 = ssub.s32 %s9, 2
      // Predicated region
      $region41: #{tpu_custom_call.1} parent=39 // pred_check
        %p365 = pneg %p141
      $region42: #{tpu_custom_call.1} parent=39 // pred_check_branch
        %367 = sbr.rel (%p365) target = $region44
      $region43: #{tpu_custom_call.1} parent=39 // pred_region
        %s368 = smul.u32 2, %s23
        %p369 = scmp.lt.s32.totalorder %s22, 1
        %s370 = scalar_select %p369, %s22, 1
        %p371 = scmp.lt.s32.totalorder %s24, 3
        %s372 = scalar_select %p371, %s24, 3
        %p373 = scmp.lt.s32.totalorder %s368, 1
        %s374 = scalar_select %p373, %s368, 1
        %s375 = smul.addr %s372, 2
        %s376 = sadd.s32 %s374, %s375
        %s377 = smul.addr %s370, 8
        %s378 = sadd.s32 %s376, %s377
        %s379 = smul.addr %s378, 4
        %s380 = scalar_lea.vmem %s3, %s379
      $region44: #{tpu_custom_call.1} parent=39 // pred_fallthru
        _
    $region40: #{tpu_custom_call.1} parent=5 // pred_fallthru
      _
  $region6: #{tpu_custom_call.1} parent=0 // loop_footer
    %s13 = sadd.s32 1, %s9
  $region7: #{tpu_custom_call.1} parent=0 // loop_footer_branch
    %8 = sbr.rel target = $region3
  $region8: #{tpu_custom_call.1} parent=0 // loop_exit
    _

</llo_original>
